<compile_context>
chip_gen: v5e
topology: v5e:2x2
jax: 0.10.0
libtpu: 0.0.40
codegen_flags: <defaults>
</compile_context>

<pallas_src>
import jax
import jax.numpy as jnp
import numpy as np
from jax import lax
from jax.experimental import pallas as pl
from jax.experimental.pallas import tpu as pltpu


def _lrelu(t, slope=0.01):
    return jnp.where(t >= 0, t, slope * t)


def _inorm_dense(y, m, eps=1e-5):
    """InstanceNorm over H*W for data in the lane-dense (H, W*C) layout.

    `m` is the (W*C, W*C) channel-match mask pre-scaled by 1/(H*W); one MXU
    matmul produces the per-channel means already replicated across lanes
    (i.e. in broadcast layout), so no cross-lane shuffles are needed.
    """
    mean = jnp.sum(jnp.dot(y, m, preferred_element_type=jnp.float32),
                   axis=0, keepdims=True)
    c = y - mean
    var = jnp.sum(jnp.dot(c * c, m, preferred_element_type=jnp.float32),
                  axis=0, keepdims=True)                # biased variance
    return c * lax.rsqrt(var + eps)


def unet_res_block_kernel(xp_ref, wb1_ref, wb2_ref, wb3_ref, m_ref, out_ref):
    # xp_ref : (1, H+2, W*CIN)     H-halo-padded input, lane-dense (f32)
    # wb1_ref: (3, W*CIN, W*COUT)  conv1 banded weights (one per kernel row)
    # wb2_ref: (3, W*COUT, W*COUT) conv2 banded weights
    # wb3_ref: (W*CIN, W*COUT)     conv3 1x1 block-diagonal weights
    # m_ref  : (W*COUT, W*COUT)    channel-match mask / (H*W), f32
    # out_ref: (1, H, W*COUT)      lane-dense output
    H = out_ref.shape[1]
    WC = out_ref.shape[2]
    cdt = wb1_ref.dtype                      # MXU operand dtype (bf16 or f32)
    m = m_ref[...]

    xp = xp_ref[0].astype(cdt)               # (H+2, W*CIN)

    # ---- conv1: one banded MXU matmul per kernel row -> IN -> LeakyReLU ----
    y1 = jnp.dot(xp[0:H, :], wb1_ref[0], preferred_element_type=jnp.float32)
    y1 += jnp.dot(xp[1:H + 1, :], wb1_ref[1], preferred_element_type=jnp.float32)
    y1 += jnp.dot(xp[2:H + 2, :], wb1_ref[2], preferred_element_type=jnp.float32)
    y1 = _lrelu(_inorm_dense(y1, m))

    # ---- conv2: H halo via value-level row shifts (no scratch) -> IN ----
    zrow = jnp.zeros((1, WC), jnp.float32)
    up = jnp.concatenate([zrow, y1[0:H - 1, :]], axis=0).astype(cdt)   # row h-1
    mid = y1.astype(cdt)                                               # row h
    dn = jnp.concatenate([y1[1:H, :], zrow], axis=0).astype(cdt)       # row h+1
    y2 = jnp.dot(up, wb2_ref[0], preferred_element_type=jnp.float32)
    y2 += jnp.dot(mid, wb2_ref[1], preferred_element_type=jnp.float32)
    y2 += jnp.dot(dn, wb2_ref[2], preferred_element_type=jnp.float32)
    y2 = _inorm_dense(y2, m)

    # ---- conv3 residual: 1x1 conv == block-diagonal matmul -> IN ----
    res = jnp.dot(xp[1:H + 1, :], wb3_ref[...],
                  preferred_element_type=jnp.float32)
    res = _inorm_dense(res, m)

    # ---- add + LeakyReLU; store lane-dense ----
    out_ref[0] = _lrelu(y2 + res).astype(out_ref.dtype)


def _band3x3(w_hwio, W):
    """(3,3,CIN,COUT) HWIO -> (3, W*CIN, W*COUT) per-kernel-row band matrices
    encoding the width-direction 3-tap conv with zero padding=1."""
    _, _, cin, cout = w_hwio.shape
    sel = np.zeros((3, W, W), np.float32)        # sel[kw, w_in, w_out]
    for kw in range(3):
        for wo in range(W):
            wi = wo + kw - 1
            if 0 <= wi < W:
                sel[kw, wi, wo] = 1.0
    band = jnp.einsum('kvw,hkio->hviwo', sel, w_hwio)
    return band.reshape(3, W * cin, W * cout)


def _blockdiag_1x1(w3, W):
    """(CIN, COUT) -> (W*CIN, W*COUT) block-diagonal matrix (1x1 conv)."""
    return jnp.kron(jnp.eye(W, dtype=w3.dtype), w3)


def _channel_mask(W, C):
    """(W*C, W*C) mask with 1 where the channel indices match."""
    return np.kron(np.ones((W, W), np.float32), np.eye(C, dtype=np.float32))


def unet_res_block(x_nchw, w1, w2, w3, *, matmul_dtype=jnp.bfloat16):
    """UnetResBlock forward.

    x_nchw: (N, CIN, H, W); w1: (3,3,CIN,COUT) HWIO; w2: (3,3,COUT,COUT) HWIO;
    w3: (CIN, COUT).  Returns (N, COUT, H, W).
    """
    N, CIN, H, W = x_nchw.shape
    COUT = w1.shape[-1]

    # NCHW -> lane-dense (N, H, W*CIN); the H halo is padded once in HBM.
    x = jnp.transpose(x_nchw, (0, 2, 3, 1)).reshape(N, H, W * CIN)
    xpad = jnp.pad(x, ((0, 0), (1, 1), (0, 0)))

    # Precompute banded / block-diagonal weights and the norm mask.
    wb1 = _band3x3(w1, W).astype(matmul_dtype)          # (3, W*CIN,  W*COUT)
    wb2 = _band3x3(w2, W).astype(matmul_dtype)          # (3, W*COUT, W*COUT)
    wb3 = _blockdiag_1x1(w3, W).astype(matmul_dtype)    # (W*CIN, W*COUT)
    m = jnp.asarray(_channel_mask(W, COUT) / float(H * W), jnp.float32)

    out_flat = pl.pallas_call(
        unet_res_block_kernel,
        out_shape=jax.ShapeDtypeStruct((N, H, W * COUT), x_nchw.dtype),
        grid_spec=pltpu.PrefetchScalarGridSpec(
            num_scalar_prefetch=0,
            grid=(N,),
            in_specs=[
                pl.BlockSpec((1, H + 2, W * CIN), lambda n: (n, 0, 0)),
                # Constant index maps: weights/mask stay resident across steps.
                pl.BlockSpec((3, W * CIN, W * COUT), lambda n: (0, 0, 0)),
                pl.BlockSpec((3, W * COUT, W * COUT), lambda n: (0, 0, 0)),
                pl.BlockSpec((W * CIN, W * COUT), lambda n: (0, 0)),
                pl.BlockSpec((W * COUT, W * COUT), lambda n: (0, 0)),
            ],
            out_specs=pl.BlockSpec((1, H, W * COUT), lambda n: (n, 0, 0)),
        ),
        compiler_params=pltpu.CompilerParams(
            dimension_semantics=("parallel",)),   # v7x: batch over both TCs
    )(xpad, wb1, wb2, wb3, m)

    out_nhwc = out_flat.reshape(N, H, W, COUT)
    return jnp.transpose(out_nhwc, (0, 3, 1, 2))  # back to NCHW


def reference(x_nchw, w1, w2, w3):
    """Pure-JAX f32 reference of the PyTorch forward (NCHW)."""
    def conv(x, w, pad):
        return lax.conv_general_dilated(
            x, w, window_strides=(1, 1),
            padding=[(pad, pad), (pad, pad)],
            dimension_numbers=('NCHW', 'HWIO', 'NCHW'))

    def inorm(t, eps=1e-5):
        mean = jnp.mean(t, axis=(2, 3), keepdims=True)
        var = jnp.mean((t - mean) ** 2, axis=(2, 3), keepdims=True)
        return (t - mean) / jnp.sqrt(var + eps)

    def lrelu(t):
        return jnp.where(t >= 0, t, 0.01 * t)

    out = lrelu(inorm(conv(x_nchw, w1, 1)))
    out = inorm(conv(out, w2, 1))
    res = inorm(conv(x_nchw, w3[None, None], 0))
    return lrelu(out + res)


if __name__ == "__main__":
    # spatial_dims=2, in=4, out=8, kernel_size=3, stride=1
    # (downsample=True since in != out -> conv3 residual path used).
    N, CIN, COUT, H, W = 2, 4, 8, 16, 16

    key = jax.random.PRNGKey(0)
    kx, k1, k2, k3 = jax.random.split(key, 4)
    x = jax.random.normal(kx, (N, CIN, H, W), dtype=jnp.float32)
    # Weights in HWIO layout (kh, kw, Cin, Cout).
    w1 = 0.1 * jax.random.normal(k1, (3, 3, CIN, COUT), dtype=jnp.float32)
    w2 = 0.1 * jax.random.normal(k2, (3, 3, COUT, COUT), dtype=jnp.float32)
    w3 = 0.1 * jax.random.normal(k3, (CIN, COUT), dtype=jnp.float32)

    ref = jax.block_until_ready(reference(x, w1, w2, w3))

    # 1) f32 MXU operands: near-bit-faithful check of the forward semantics.
    out_f32 = jax.block_until_ready(
        unet_res_block(x, w1, w2, w3, matmul_dtype=jnp.float32))
    assert out_f32.shape == (N, COUT, H, W), out_f32.shape
    assert jnp.allclose(out_f32, ref, rtol=1e-3, atol=1e-3), float(
        jnp.max(jnp.abs(out_f32 - ref)))

    # 2) bf16 MXU operands (f32 accumulation): the performance configuration.
    out_bf16 = jax.block_until_ready(unet_res_block(x, w1, w2, w3))
    assert out_bf16.shape == (N, COUT, H, W), out_bf16.shape
    assert jnp.allclose(out_bf16, ref, rtol=5e-2, atol=5e-2), float(
        jnp.max(jnp.abs(out_bf16 - ref)))

    print("KERNEL_OK")
</pallas_src>

<mosaic_0001>
module attributes {stable_mosaic.version = 11 : i64} {
  func.func @unet_res_block_kernel(%arg0: i32, %arg1: memref<1x18x64xf32, #tpu.memory_space<vmem>>, %arg2: memref<3x64x128xf32, #tpu.memory_space<vmem>>, %arg3: memref<3x128x128xf32, #tpu.memory_space<vmem>>, %arg4: memref<64x128xf32, #tpu.memory_space<vmem>>, %arg5: memref<128x128xf32, #tpu.memory_space<vmem>>, %arg6: memref<1x16x128xf32, #tpu.memory_space<vmem>>) attributes {dimension_semantics = [#tpu.dimension_semantics<parallel>], iteration_bounds = array<i64: 2>, scalar_prefetch = 0 : i64, scratch_operands = 0 : i64, tpu.core_type = #tpu.core_type<tc>, window_params = [{transform_indices = @transform_0, window_bounds = array<i64: 1, 18, 64>}, {pipeline_mode = #tpu.pipeline_mode<synchronous>, transform_indices = @transform_1, window_bounds = array<i64: 3, 64, 128>}, {pipeline_mode = #tpu.pipeline_mode<synchronous>, transform_indices = @transform_2, window_bounds = array<i64: 3, 128, 128>}, {pipeline_mode = #tpu.pipeline_mode<synchronous>, transform_indices = @transform_3, window_bounds = array<i64: 64, 128>}, {pipeline_mode = #tpu.pipeline_mode<synchronous>, transform_indices = @transform_4, window_bounds = array<i64: 128, 128>}, {transform_indices = @transform_5, window_bounds = array<i64: 1, 16, 128>}]} {
    %c0 = arith.constant 0 : index
    %c0_0 = arith.constant 0 : index
    %0 = vector.load %arg5[%c0, %c0_0] : memref<128x128xf32, #tpu.memory_space<vmem>>, vector<128x128xf32>
    %c0_1 = arith.constant 0 : index
    %c0_2 = arith.constant 0 : index
    %c0_3 = arith.constant 0 : index
    %1 = vector.load %arg1[%c0_1, %c0_2, %c0_3] : memref<1x18x64xf32, #tpu.memory_space<vmem>>, vector<1x18x64xf32>
    %2 = vector.shape_cast %1 : vector<1x18x64xf32> to vector<18x64xf32>
    %3 = vector.extract_strided_slice %2 {offsets = [0, 0], sizes = [16, 64], strides = [1, 1]} : vector<18x64xf32> to vector<16x64xf32>
    %c0_4 = arith.constant 0 : index
    %c0_5 = arith.constant 0 : index
    %c0_6 = arith.constant 0 : index
    %4 = vector.load %arg2[%c0_4, %c0_5, %c0_6] : memref<3x64x128xf32, #tpu.memory_space<vmem>>, vector<1x64x128xf32>
    %5 = vector.shape_cast %4 : vector<1x64x128xf32> to vector<64x128xf32>
    %cst = arith.constant dense<0.000000e+00> : vector<16x128xf32>
    %6 = tpu.matmul %3, %5, %cst {dimension_numbers = #tpu.dot_dimension_numbers<[1], [0], [0], [1], [0, 0, 1, 1], [], []>} : vector<16x64xf32>, vector<64x128xf32>, vector<16x128xf32> -> vector<16x128xf32>
    %7 = vector.extract_strided_slice %2 {offsets = [1, 0], sizes = [16, 64], strides = [1, 1]} : vector<18x64xf32> to vector<16x64xf32>
    %c1 = arith.constant 1 : index
    %c0_7 = arith.constant 0 : index
    %c0_8 = arith.constant 0 : index
    %8 = vector.load %arg2[%c1, %c0_7, %c0_8] : memref<3x64x128xf32, #tpu.memory_space<vmem>>, vector<1x64x128xf32>
    %9 = vector.shape_cast %8 : vector<1x64x128xf32> to vector<64x128xf32>
    %cst_9 = arith.constant dense<0.000000e+00> : vector<16x128xf32>
    %10 = tpu.matmul %7, %9, %cst_9 {dimension_numbers = #tpu.dot_dimension_numbers<[1], [0], [0], [1], [0, 0, 1, 1], [], []>} : vector<16x64xf32>, vector<64x128xf32>, vector<16x128xf32> -> vector<16x128xf32>
    %11 = arith.addf %6, %10 : vector<16x128xf32>
    %12 = vector.extract_strided_slice %2 {offsets = [2, 0], sizes = [16, 64], strides = [1, 1]} : vector<18x64xf32> to vector<16x64xf32>
    %c2 = arith.constant 2 : index
    %c0_10 = arith.constant 0 : index
    %c0_11 = arith.constant 0 : index
    %13 = vector.load %arg2[%c2, %c0_10, %c0_11] : memref<3x64x128xf32, #tpu.memory_space<vmem>>, vector<1x64x128xf32>
    %14 = vector.shape_cast %13 : vector<1x64x128xf32> to vector<64x128xf32>
    %cst_12 = arith.constant dense<0.000000e+00> : vector<16x128xf32>
    %15 = tpu.matmul %12, %14, %cst_12 {dimension_numbers = #tpu.dot_dimension_numbers<[1], [0], [0], [1], [0, 0, 1, 1], [], []>} : vector<16x64xf32>, vector<64x128xf32>, vector<16x128xf32> -> vector<16x128xf32>
    %16 = arith.addf %11, %15 : vector<16x128xf32>
    %cst_13 = arith.constant dense<0.000000e+00> : vector<16x128xf32>
    %17 = tpu.matmul %16, %0, %cst_13 {dimension_numbers = #tpu.dot_dimension_numbers<[1], [0], [0], [1], [0, 0, 1, 1], [], []>} : vector<16x128xf32>, vector<128x128xf32>, vector<16x128xf32> -> vector<16x128xf32>
    %cst_14 = arith.constant dense<0.000000e+00> : vector<128xf32>
    %18 = vector.multi_reduction <add>, %17, %cst_14 [0] : vector<16x128xf32> to vector<128xf32>
    %19 = vector.shape_cast %18 : vector<128xf32> to vector<1x128xf32>
    %20 = vector.broadcast %19 : vector<1x128xf32> to vector<16x128xf32>
    %21 = arith.subf %16, %20 : vector<16x128xf32>
    %22 = arith.mulf %21, %21 : vector<16x128xf32>
    %cst_15 = arith.constant dense<0.000000e+00> : vector<16x128xf32>
    %23 = tpu.matmul %22, %0, %cst_15 {dimension_numbers = #tpu.dot_dimension_numbers<[1], [0], [0], [1], [0, 0, 1, 1], [], []>} : vector<16x128xf32>, vector<128x128xf32>, vector<16x128xf32> -> vector<16x128xf32>
    %cst_16 = arith.constant dense<0.000000e+00> : vector<128xf32>
    %24 = vector.multi_reduction <add>, %23, %cst_16 [0] : vector<16x128xf32> to vector<128xf32>
    %25 = vector.shape_cast %24 : vector<128xf32> to vector<1x128xf32>
    %cst_17 = arith.constant 9.99999974E-6 : f32
    %26 = vector.broadcast %cst_17 : f32 to vector<1x128xf32>
    %27 = arith.addf %25, %26 : vector<1x128xf32>
    %28 = math.rsqrt %27 : vector<1x128xf32>
    %29 = vector.broadcast %28 : vector<1x128xf32> to vector<16x128xf32>
    %30 = arith.mulf %21, %29 : vector<16x128xf32>
    %cst_18 = arith.constant 0.000000e+00 : f32
    %31 = vector.broadcast %cst_18 : f32 to vector<16x128xf32>
    %32 = arith.cmpf oge, %30, %31 : vector<16x128xf32>
    %cst_19 = arith.constant 0.00999999977 : f32
    %33 = vector.broadcast %cst_19 : f32 to vector<16x128xf32>
    %34 = arith.mulf %33, %30 : vector<16x128xf32>
    %35 = arith.select %32, %30, %34 : vector<16x128xi1>, vector<16x128xf32>
    %cst_20 = arith.constant 0.000000e+00 : f32
    %36 = vector.broadcast %cst_20 : f32 to vector<1x128xf32>
    %37 = vector.extract_strided_slice %35 {offsets = [0, 0], sizes = [15, 128], strides = [1, 1]} : vector<16x128xf32> to vector<15x128xf32>
    %38 = tpu.concatenate %36, %37 in 0 : vector<1x128xf32>, vector<15x128xf32> -> vector<16x128xf32>
    %39 = vector.extract_strided_slice %35 {offsets = [1, 0], sizes = [15, 128], strides = [1, 1]} : vector<16x128xf32> to vector<15x128xf32>
    %40 = tpu.concatenate %39, %36 in 0 : vector<15x128xf32>, vector<1x128xf32> -> vector<16x128xf32>
    %c0_21 = arith.constant 0 : index
    %c0_22 = arith.constant 0 : index
    %c0_23 = arith.constant 0 : index
    %41 = vector.load %arg3[%c0_21, %c0_22, %c0_23] : memref<3x128x128xf32, #tpu.memory_space<vmem>>, vector<1x128x128xf32>
    %42 = vector.shape_cast %41 : vector<1x128x128xf32> to vector<128x128xf32>
    %cst_24 = arith.constant dense<0.000000e+00> : vector<16x128xf32>
    %43 = tpu.matmul %38, %42, %cst_24 {dimension_numbers = #tpu.dot_dimension_numbers<[1], [0], [0], [1], [0, 0, 1, 1], [], []>} : vector<16x128xf32>, vector<128x128xf32>, vector<16x128xf32> -> vector<16x128xf32>
    %c1_25 = arith.constant 1 : index
    %c0_26 = arith.constant 0 : index
    %c0_27 = arith.constant 0 : index
    %44 = vector.load %arg3[%c1_25, %c0_26, %c0_27] : memref<3x128x128xf32, #tpu.memory_space<vmem>>, vector<1x128x128xf32>
    %45 = vector.shape_cast %44 : vector<1x128x128xf32> to vector<128x128xf32>
    %cst_28 = arith.constant dense<0.000000e+00> : vector<16x128xf32>
    %46 = tpu.matmul %35, %45, %cst_28 {dimension_numbers = #tpu.dot_dimension_numbers<[1], [0], [0], [1], [0, 0, 1, 1], [], []>} : vector<16x128xf32>, vector<128x128xf32>, vector<16x128xf32> -> vector<16x128xf32>
    %47 = arith.addf %43, %46 : vector<16x128xf32>
    %c2_29 = arith.constant 2 : index
    %c0_30 = arith.constant 0 : index
    %c0_31 = arith.constant 0 : index
    %48 = vector.load %arg3[%c2_29, %c0_30, %c0_31] : memref<3x128x128xf32, #tpu.memory_space<vmem>>, vector<1x128x128xf32>
    %49 = vector.shape_cast %48 : vector<1x128x128xf32> to vector<128x128xf32>
    %cst_32 = arith.constant dense<0.000000e+00> : vector<16x128xf32>
    %50 = tpu.matmul %40, %49, %cst_32 {dimension_numbers = #tpu.dot_dimension_numbers<[1], [0], [0], [1], [0, 0, 1, 1], [], []>} : vector<16x128xf32>, vector<128x128xf32>, vector<16x128xf32> -> vector<16x128xf32>
    %51 = arith.addf %47, %50 : vector<16x128xf32>
    %cst_33 = arith.constant dense<0.000000e+00> : vector<16x128xf32>
    %52 = tpu.matmul %51, %0, %cst_33 {dimension_numbers = #tpu.dot_dimension_numbers<[1], [0], [0], [1], [0, 0, 1, 1], [], []>} : vector<16x128xf32>, vector<128x128xf32>, vector<16x128xf32> -> vector<16x128xf32>
    %cst_34 = arith.constant dense<0.000000e+00> : vector<128xf32>
    %53 = vector.multi_reduction <add>, %52, %cst_34 [0] : vector<16x128xf32> to vector<128xf32>
    %54 = vector.shape_cast %53 : vector<128xf32> to vector<1x128xf32>
    %55 = vector.broadcast %54 : vector<1x128xf32> to vector<16x128xf32>
    %56 = arith.subf %51, %55 : vector<16x128xf32>
    %57 = arith.mulf %56, %56 : vector<16x128xf32>
    %cst_35 = arith.constant dense<0.000000e+00> : vector<16x128xf32>
    %58 = tpu.matmul %57, %0, %cst_35 {dimension_numbers = #tpu.dot_dimension_numbers<[1], [0], [0], [1], [0, 0, 1, 1], [], []>} : vector<16x128xf32>, vector<128x128xf32>, vector<16x128xf32> -> vector<16x128xf32>
    %cst_36 = arith.constant dense<0.000000e+00> : vector<128xf32>
    %59 = vector.multi_reduction <add>, %58, %cst_36 [0] : vector<16x128xf32> to vector<128xf32>
    %60 = vector.shape_cast %59 : vector<128xf32> to vector<1x128xf32>
    %cst_37 = arith.constant 9.99999974E-6 : f32
    %61 = vector.broadcast %cst_37 : f32 to vector<1x128xf32>
    %62 = arith.addf %60, %61 : vector<1x128xf32>
    %63 = math.rsqrt %62 : vector<1x128xf32>
    %64 = vector.broadcast %63 : vector<1x128xf32> to vector<16x128xf32>
    %65 = arith.mulf %56, %64 : vector<16x128xf32>
    %66 = vector.extract_strided_slice %2 {offsets = [1, 0], sizes = [16, 64], strides = [1, 1]} : vector<18x64xf32> to vector<16x64xf32>
    %c0_38 = arith.constant 0 : index
    %c0_39 = arith.constant 0 : index
    %67 = vector.load %arg4[%c0_38, %c0_39] : memref<64x128xf32, #tpu.memory_space<vmem>>, vector<64x128xf32>
    %cst_40 = arith.constant dense<0.000000e+00> : vector<16x128xf32>
    %68 = tpu.matmul %66, %67, %cst_40 {dimension_numbers = #tpu.dot_dimension_numbers<[1], [0], [0], [1], [0, 0, 1, 1], [], []>} : vector<16x64xf32>, vector<64x128xf32>, vector<16x128xf32> -> vector<16x128xf32>
    %cst_41 = arith.constant dense<0.000000e+00> : vector<16x128xf32>
    %69 = tpu.matmul %68, %0, %cst_41 {dimension_numbers = #tpu.dot_dimension_numbers<[1], [0], [0], [1], [0, 0, 1, 1], [], []>} : vector<16x128xf32>, vector<128x128xf32>, vector<16x128xf32> -> vector<16x128xf32>
    %cst_42 = arith.constant dense<0.000000e+00> : vector<128xf32>
    %70 = vector.multi_reduction <add>, %69, %cst_42 [0] : vector<16x128xf32> to vector<128xf32>
    %71 = vector.shape_cast %70 : vector<128xf32> to vector<1x128xf32>
    %72 = vector.broadcast %71 : vector<1x128xf32> to vector<16x128xf32>
    %73 = arith.subf %68, %72 : vector<16x128xf32>
    %74 = arith.mulf %73, %73 : vector<16x128xf32>
    %cst_43 = arith.constant dense<0.000000e+00> : vector<16x128xf32>
    %75 = tpu.matmul %74, %0, %cst_43 {dimension_numbers = #tpu.dot_dimension_numbers<[1], [0], [0], [1], [0, 0, 1, 1], [], []>} : vector<16x128xf32>, vector<128x128xf32>, vector<16x128xf32> -> vector<16x128xf32>
    %cst_44 = arith.constant dense<0.000000e+00> : vector<128xf32>
    %76 = vector.multi_reduction <add>, %75, %cst_44 [0] : vector<16x128xf32> to vector<128xf32>
    %77 = vector.shape_cast %76 : vector<128xf32> to vector<1x128xf32>
    %cst_45 = arith.constant 9.99999974E-6 : f32
    %78 = vector.broadcast %cst_45 : f32 to vector<1x128xf32>
    %79 = arith.addf %77, %78 : vector<1x128xf32>
    %80 = math.rsqrt %79 : vector<1x128xf32>
    %81 = vector.broadcast %80 : vector<1x128xf32> to vector<16x128xf32>
    %82 = arith.mulf %73, %81 : vector<16x128xf32>
    %83 = arith.addf %65, %82 : vector<16x128xf32>
    %cst_46 = arith.constant 0.000000e+00 : f32
    %84 = vector.broadcast %cst_46 : f32 to vector<16x128xf32>
    %85 = arith.cmpf oge, %83, %84 : vector<16x128xf32>
    %cst_47 = arith.constant 0.00999999977 : f32
    %86 = vector.broadcast %cst_47 : f32 to vector<16x128xf32>
    %87 = arith.mulf %86, %83 : vector<16x128xf32>
    %88 = arith.select %85, %83, %87 : vector<16x128xi1>, vector<16x128xf32>
    %c0_48 = arith.constant 0 : index
    %c0_49 = arith.constant 0 : index
    %c0_50 = arith.constant 0 : index
    %89 = vector.load %arg6[%c0_48, %c0_49, %c0_50] : memref<1x16x128xf32, #tpu.memory_space<vmem>>, vector<1x16x128xf32>
    %90 = vector.shape_cast %89 : vector<1x16x128xf32> to vector<16x128xf32>
    %91 = vector.shape_cast %88 : vector<16x128xf32> to vector<1x16x128xf32>
    tpu.vector_store %arg6[%c0_48, %c0_49, %c0_50], %91 {strides = array<i32>} : memref<1x16x128xf32, #tpu.memory_space<vmem>>, vector<1x16x128xf32>,
    return
  }
  func.func @transform_0(%arg0: i32) -> (i32, i32, i32) {
    %c0_i32 = arith.constant 0 : i32
    %c0_i32_0 = arith.constant 0 : i32
    %c0_i32_1 = arith.constant 0 : i32
    return %arg0, %c0_i32, %c0_i32_0 : i32, i32, i32
  }
  func.func @transform_1(%arg0: i32) -> (i32, i32, i32) {
    %c0_i32 = arith.constant 0 : i32
    %c0_i32_0 = arith.constant 0 : i32
    %c0_i32_1 = arith.constant 0 : i32
    %c0_i32_2 = arith.constant 0 : i32
    return %c0_i32, %c0_i32_0, %c0_i32_1 : i32, i32, i32
  }
  func.func @transform_2(%arg0: i32) -> (i32, i32, i32) {
    %c0_i32 = arith.constant 0 : i32
    %c0_i32_0 = arith.constant 0 : i32
    %c0_i32_1 = arith.constant 0 : i32
    %c0_i32_2 = arith.constant 0 : i32
    return %c0_i32, %c0_i32_0, %c0_i32_1 : i32, i32, i32
  }
  func.func @transform_3(%arg0: i32) -> (i32, i32) {
    %c0_i32 = arith.constant 0 : i32
    %c0_i32_0 = arith.constant 0 : i32
    %c0_i32_1 = arith.constant 0 : i32
    return %c0_i32, %c0_i32_0 : i32, i32
  }
  func.func @transform_4(%arg0: i32) -> (i32, i32) {
    %c0_i32 = arith.constant 0 : i32
    %c0_i32_0 = arith.constant 0 : i32
    %c0_i32_1 = arith.constant 0 : i32
    return %c0_i32, %c0_i32_0 : i32, i32
  }
  func.func @transform_5(%arg0: i32) -> (i32, i32, i32) {
    %c0_i32 = arith.constant 0 : i32
    %c0_i32_0 = arith.constant 0 : i32
    %c0_i32_1 = arith.constant 0 : i32
    return %arg0, %c0_i32, %c0_i32_0 : i32, i32, i32
  }
}

</mosaic_0001>

<llo_original>
// kernel: tpu_custom_call.1
$region0: #{tpu_custom_call.1}
  #allocation0 [shape = 'u32[]', space=smem, size = 0x4, offset = 0x4, fixed_abs, tag = 'smem constant byte address 0x4 - core index']
  #allocation1 [shape = 'u32[72,128]{1,0:T(1,128)}', space=vmem, size = 0x9000, scoped, tag = 'internal scratch']
  %s0 = inlined_call_operand.vmem [shape: f32[2,18,64], index: 0, kind: input, shape index: {}]
  %s1 = inlined_call_operand.hbm [shape: f32[3,64,128], index: 1, kind: input, shape index: {}]
  %s2 = inlined_call_operand.hbm [shape: f32[3,128,128], index: 2, kind: input, shape index: {}]
  %s3 = inlined_call_operand.vmem [shape: f32[64,128], index: 3, kind: input, shape index: {}]
  %s4 = inlined_call_operand.hbm [shape: f32[128,128], index: 4, kind: input, shape index: {}]
  %s5 = inlined_call_operand.hbm [shape: f32[2,16,128], index: 5, kind: output, shape index: {}]
  %s6 = sld [smem:[#allocation0]]
  $region65: #{tpu_custom_call.1} parent=0
    _
  %s8 = ssub.s32 1, %s6
  %s9 = scalar_select 0, %s8, %s6
  $region1: #{tpu_custom_call.1} parent=0
    #allocation2 [shape = 'u8[98304]{0}', space=vmem, size = 0x18000, scoped, tag = 'input window, operand 1, single buffered']
    #allocation3 [shape = 's32[2]{0}', space=sflag, size = 0x8, scoped, tag = 'scoped memory for tpu_custom_call.1']
    #allocation4 [shape = 's32[2]{0}', space=sflag, size = 0x8, scoped, tag = 'scoped memory for tpu_custom_call.1']
    #allocation5 [shape = 'u8[196608]{0}', space=vmem, size = 0x30000, scoped, tag = 'input window, operand 2, single buffered']
    #allocation6 [shape = 's32[1]{0}', space=sflag, size = 0x4, scoped, tag = 'scoped memory for tpu_custom_call.1']
    #allocation7 [shape = 'u8[65536]{0}', space=vmem, size = 0x10000, scoped, tag = 'input window, operand 4, single buffered']
    #allocation8 [shape = 'u8[16384]{0}', space=vmem, size = 0x4000, scoped, tag = 'output window, operand 0']
    %10 = vsyncpa [#allocation3], 0
    %11 = vsyncpa [#allocation6], 0
    %12 = vsyncpa [#allocation4], 0
    %s13 = scalar_lea.sflag [#allocation4], 1
    %14 = vsyncpa %s13, 0
    loop: start=0, step=1, limit=4
    $region2: #{tpu_custom_call.1} parent=1 // loop_pre_header
      _
    $region3: #{tpu_custom_call.1} parent=1 // loop_header
      %s16 = sphi 0, %s20
      %p17 = scmp.ge.s32.totalorder %s16, 4
      %s26 = sphi 0, %s28
      %s29 = sphi 0, %s26
      %s30 = sphi 0, %s29
      %s46 = sphi 0, %s30
      %s50 = sphi 0, %s50
      %s52 = sphi 0, %s50
      %s53 = sphi 0, %s52
      %s67 = sphi 0, %s53
      %s71 = sphi 0, %s71
      %s73 = sphi 0, %s71
      %s74 = sphi 0, %s73
      %s88 = sphi 0, %s74
      %s92 = sphi 0, %s92
      %s94 = sphi 0, %s92
      %s95 = sphi 0, %s94
      %s109 = sphi 0, %s95
      %s113 = sphi 0, %s113
      %s115 = sphi 0, %s113
      %s116 = sphi 0, %s115
      %s130 = sphi 0, %s116
      %s136 = sphi 0, %s138
      %s139 = sphi 0, %s136
      %s140 = sphi 0, %s139
      %s156 = sphi 0, %s140
    $region4: #{tpu_custom_call.1} parent=1 // loop_header_branch
      %19 = sbr.rel (%p17) target = $region8
    $region5: #{tpu_custom_call.1} parent=1 // loop_body
      %s21 = ssub.s32 %s16, 1
      %s22 = ssub.s32 %s16, 2
      %s23 = sadd.s32 %s16, 1
      %s24 = ssub.s32 %s16, %s23
      %p25 = scmp.eq.s32.totalorder %s24, 0
      %s27 = sadd.s32 %s26, 1
      %s28 = scalar_select %p25, %s26, %s27
      %p31 = pneg %p25
      %p32 = scmp.eq.s32.totalorder %s16, 1
      %p33 = por %p31, %p32
      %p34 = scmp.ne.s32.totalorder %s26, %s29
      %p35 = scmp.eq.s32.totalorder %s16, 0
      %p36 = por %p34, %p35
      %p37 = scmp.ne.s32.totalorder %s26, %s29
      %p38 = scmp.eq.s32.totalorder %s21, 1
      %p39 = por %p37, %p38
      %p40 = scmp.ne.s32.totalorder %s29, %s30
      %p41 = scmp.eq.s32.totalorder %s21, 0
      %p42 = por %p40, %p41
      %p43 = scmp.ne.s32.totalorder %s29, %s30
      %p44 = scmp.eq.s32.totalorder %s22, 1
      %p45 = por %p43, %p44
      %p47 = scmp.ne.s32.totalorder %s30, %s46
      %p48 = scmp.eq.s32.totalorder %s22, 0
      %p49 = por %p47, %p48
      %s51 = sadd.s32 %s50, 1
      %p54 = scmp.eq.s32.totalorder %s16, 1
      %p55 = scmp.ne.s32.totalorder %s50, %s52
      %p56 = scmp.eq.s32.totalorder %s16, 0
      %p57 = por %p55, %p56
      %p58 = scmp.ne.s32.totalorder %s50, %s52
      %p59 = scmp.eq.s32.totalorder %s21, 1
      %p60 = por %p58, %p59
      %p61 = scmp.ne.s32.totalorder %s52, %s53
      %p62 = scmp.eq.s32.totalorder %s21, 0
      %p63 = por %p61, %p62
      %p64 = scmp.ne.s32.totalorder %s52, %s53
      %p65 = scmp.eq.s32.totalorder %s22, 1
      %p66 = por %p64, %p65
      %p68 = scmp.ne.s32.totalorder %s53, %s67
      %p69 = scmp.eq.s32.totalorder %s22, 0
      %p70 = por %p68, %p69
      %s72 = sadd.s32 %s71, 1
      %p75 = scmp.eq.s32.totalorder %s16, 1
      %p76 = scmp.ne.s32.totalorder %s71, %s73
      %p77 = scmp.eq.s32.totalorder %s16, 0
      %p78 = por %p76, %p77
      %p79 = scmp.ne.s32.totalorder %s71, %s73
      %p80 = scmp.eq.s32.totalorder %s21, 1
      %p81 = por %p79, %p80
      %p82 = scmp.ne.s32.totalorder %s73, %s74
      %p83 = scmp.eq.s32.totalorder %s21, 0
      %p84 = por %p82, %p83
      %p85 = scmp.ne.s32.totalorder %s73, %s74
      %p86 = scmp.eq.s32.totalorder %s22, 1
      %p87 = por %p85, %p86
      %p89 = scmp.ne.s32.totalorder %s74, %s88
      %p90 = scmp.eq.s32.totalorder %s22, 0
      %p91 = por %p89, %p90
      %s93 = sadd.s32 %s92, 1
      %p96 = scmp.eq.s32.totalorder %s16, 1
      %p97 = scmp.ne.s32.totalorder %s92, %s94
      %p98 = scmp.eq.s32.totalorder %s16, 0
      %p99 = por %p97, %p98
      %p100 = scmp.ne.s32.totalorder %s92, %s94
      %p101 = scmp.eq.s32.totalorder %s21, 1
      %p102 = por %p100, %p101
      %p103 = scmp.ne.s32.totalorder %s94, %s95
      %p104 = scmp.eq.s32.totalorder %s21, 0
      %p105 = por %p103, %p104
      %p106 = scmp.ne.s32.totalorder %s94, %s95
      %p107 = scmp.eq.s32.totalorder %s22, 1
      %p108 = por %p106, %p107
      %p110 = scmp.ne.s32.totalorder %s95, %s109
      %p111 = scmp.eq.s32.totalorder %s22, 0
      %p112 = por %p110, %p111
      %s114 = sadd.s32 %s113, 1
      %p117 = scmp.eq.s32.totalorder %s16, 1
      %p118 = scmp.ne.s32.totalorder %s113, %s115
      %p119 = scmp.eq.s32.totalorder %s16, 0
      %p120 = por %p118, %p119
      %p121 = scmp.ne.s32.totalorder %s113, %s115
      %p122 = scmp.eq.s32.totalorder %s21, 1
      %p123 = por %p121, %p122
      %p124 = scmp.ne.s32.totalorder %s115, %s116
      %p125 = scmp.eq.s32.totalorder %s21, 0
      %p126 = por %p124, %p125
      %p127 = scmp.ne.s32.totalorder %s115, %s116
      %p128 = scmp.eq.s32.totalorder %s22, 1
      %p129 = por %p127, %p128
      %p131 = scmp.ne.s32.totalorder %s116, %s130
      %p132 = scmp.eq.s32.totalorder %s22, 0
      %p133 = por %p131, %p132
      %s134 = ssub.s32 %s16, %s23
      %p135 = scmp.eq.s32.totalorder %s134, 0
      %s137 = sadd.s32 %s136, 1
      %s138 = scalar_select %p135, %s136, %s137
      %p141 = pneg %p135
      %p142 = scmp.eq.s32.totalorder %s16, 1
      %p143 = por %p141, %p142
      %p144 = scmp.ne.s32.totalorder %s136, %s139
      %p145 = scmp.eq.s32.totalorder %s16, 0
      %p146 = por %p144, %p145
      %p147 = scmp.ne.s32.totalorder %s136, %s139
      %p148 = scmp.eq.s32.totalorder %s21, 1
      %p149 = por %p147, %p148
      %p150 = scmp.ne.s32.totalorder %s139, %s140
      %p151 = scmp.eq.s32.totalorder %s21, 0
      %p152 = por %p150, %p151
      %p153 = scmp.ne.s32.totalorder %s139, %s140
      %p154 = scmp.eq.s32.totalorder %s22, 1
      %p155 = por %p153, %p154
      %p157 = scmp.ne.s32.totalorder %s140, %s156
      %p158 = scmp.eq.s32.totalorder %s22, 0
      %p159 = por %p157, %p158
      %p160 = scmp.le.s32.totalorder 1, %s16
      %p161 = scmp.lt.s32.totalorder %s16, 3
      %p162 = pnand %p160, %p161
      %p163 = pneg %p162
      // Predicated region
      $region9: #{tpu_custom_call.1} parent=5 // pred_check
        _
      $region10: #{tpu_custom_call.1} parent=5 // pred_check_branch
        %165 = sbr.rel (%p162) target = $region12
      $region11: #{tpu_custom_call.1} parent=5 // pred_region
        %s166 = ssub.s32 %s16, 1
        // Predicated region
        $region13: #{tpu_custom_call.1} parent=11 // pred_check
          %p167 = pneg %p63
        $region14: #{tpu_custom_call.1} parent=11 // pred_check_branch
          %169 = sbr.rel (%p167) target = $region16
        $region15: #{tpu_custom_call.1} parent=11 // pred_region
          %171 = vsyncadd [#allocation3], 0
          %s172 = sshll.u32 %s1, 4
          %s173 = int_to_ptr.hbm [resolvable:$true] %s172
          %s174 = sshll.u32 [#allocation2], 4
          %s175 = int_to_ptr.vmem [resolvable:$true] %s174
          %180 = dma.hbm_to_vmem [thread:$0]  %s173, 3072, %s175, [#allocation3], 128, 128, 8
        $region16: #{tpu_custom_call.1} parent=11 // pred_fallthru
          _
        // Predicated region
        $region17: #{tpu_custom_call.1} parent=11 // pred_check
          %p181 = pneg %p84
        $region18: #{tpu_custom_call.1} parent=11 // pred_check_branch
          %183 = sbr.rel (%p181) target = $region20
        $region19: #{tpu_custom_call.1} parent=11 // pred_region
          %185 = vsyncadd [#allocation6], 0
          %s186 = sshll.u32 %s2, 4
          %s187 = int_to_ptr.hbm [resolvable:$true] %s186
          %s188 = sshll.u32 [#allocation5], 4
          %s189 = int_to_ptr.vmem [resolvable:$true] %s188
          %194 = dma.hbm_to_vmem [thread:$0]  %s187, 6144, %s189, [#allocation6], 128, 128, 8
        $region20: #{tpu_custom_call.1} parent=11 // pred_fallthru
          _
        // Predicated region
        $region21: #{tpu_custom_call.1} parent=11 // pred_check
          %p195 = pneg %p105
        $region22: #{tpu_custom_call.1} parent=11 // pred_check_branch
          %197 = sbr.rel (%p195) target = $region24
        $region23: #{tpu_custom_call.1} parent=11 // pred_region
          _
        $region24: #{tpu_custom_call.1} parent=11 // pred_fallthru
          _
        // Predicated region
        $region25: #{tpu_custom_call.1} parent=11 // pred_check
          %p198 = pneg %p126
        $region26: #{tpu_custom_call.1} parent=11 // pred_check_branch
          %200 = sbr.rel (%p198) target = $region28
        $region27: #{tpu_custom_call.1} parent=11 // pred_region
          %202 = vsyncadd [#allocation6], 0
          %s203 = sshll.u32 %s4, 4
          %s204 = int_to_ptr.hbm [resolvable:$true] %s203
          %s205 = sshll.u32 [#allocation7], 4
          %s206 = int_to_ptr.vmem [resolvable:$true] %s205
          %211 = dma.hbm_to_vmem [thread:$0]  %s204, 2048, %s206, [#allocation6], 128, 128, 8
        $region28: #{tpu_custom_call.1} parent=11 // pred_fallthru
          _
      $region12: #{tpu_custom_call.1} parent=5 // pred_fallthru
        _
      %p212 = scmp.lt.s32.totalorder %s16, 2
      // Predicated region
      $region29: #{tpu_custom_call.1} parent=5 // pred_check
        %p213 = pneg %p212
      $region30: #{tpu_custom_call.1} parent=5 // pred_check_branch
        %215 = sbr.rel (%p213) target = $region32
      $region31: #{tpu_custom_call.1} parent=5 // pred_region
        // Predicated region
        $region33: #{tpu_custom_call.1} parent=31 // pred_check
          %p216 = pneg %p36
        $region34: #{tpu_custom_call.1} parent=31 // pred_check_branch
          %218 = sbr.rel (%p216) target = $region36
        $region35: #{tpu_custom_call.1} parent=31 // pred_region
          %p219 = scmp.lt.s32.totalorder %s16, 1
          %s220 = scalar_select %p219, %s16, 1
          %s221 = smul.addr %s220, 3
          %s222 = smul.addr %s221, 8
          %s223 = scalar_lea.vmem %s0, %s222
        $region36: #{tpu_custom_call.1} parent=31 // pred_fallthru
          _
      $region32: #{tpu_custom_call.1} parent=5 // pred_fallthru
        _
      %p224 = scmp.le.s32.totalorder 1, %s16
      %p225 = scmp.lt.s32.totalorder %s16, 3
      %p226 = pnand %p224, %p225
      %p227 = pneg %p226
      // Predicated region
      $region37: #{tpu_custom_call.1} parent=5 // pred_check
        _
      $region38: #{tpu_custom_call.1} parent=5 // pred_check_branch
        %229 = sbr.rel (%p226) target = $region40
      $region39: #{tpu_custom_call.1} parent=5 // pred_region
        %s230 = ssub.s32 %s16, 1
        // Predicated region
        $region41: #{tpu_custom_call.1} parent=39 // pred_check
          %p231 = pneg %p63
        $region42: #{tpu_custom_call.1} parent=39 // pred_check_branch
          %233 = sbr.rel (%p231) target = $region44
        $region43: #{tpu_custom_call.1} parent=39 // pred_region
          %235 = dma.done [#allocation3], 3072
        $region44: #{tpu_custom_call.1} parent=39 // pred_fallthru
          _
        // Predicated region
        $region45: #{tpu_custom_call.1} parent=39 // pred_check
          %p236 = pneg %p84
        $region46: #{tpu_custom_call.1} parent=39 // pred_check_branch
          %238 = sbr.rel (%p236) target = $region48
        $region47: #{tpu_custom_call.1} parent=39 // pred_region
          %240 = dma.done [#allocation6], 6144
        $region48: #{tpu_custom_call.1} parent=39 // pred_fallthru
          _
        // Predicated region
        $region49: #{tpu_custom_call.1} parent=39 // pred_check
          %p241 = pneg %p126
        $region50: #{tpu_custom_call.1} parent=39 // pred_check_branch
          %243 = sbr.rel (%p241) target = $region52
        $region51: #{tpu_custom_call.1} parent=39 // pred_region
          %245 = dma.done [#allocation6], 2048
        $region52: #{tpu_custom_call.1} parent=39 // pred_fallthru
          _
        %p246 = scmp.lt.s32.totalorder %s21, 1
        %s247 = scalar_select %p246, %s21, 1
        %s248 = smul.addr %s247, 3
        %s249 = smul.addr %s248, 8
        %s250 = scalar_lea.vmem %s0, %s249
        %p251 = pneg %p42
        %p252 = pneg %p39
        %p253 = pneg %p63
        %p254 = pneg %p60
        %p255 = pneg %p84
        %p256 = pneg %p81
        %p257 = pneg %p105
        %p258 = pneg %p102
        %p259 = pneg %p126
        %p260 = pneg %p123
        %p261 = pneg %p152
        %p262 = pneg %p149
        %s263 = sand.u32 %s139, 1
        %s264 = scalar_lea.sflag [#allocation4], %s263
        %s265 = sand.u32 %s139, 1
        %s266 = smul.addr %s265, 16
        %s267 = scalar_lea.vmem [#allocation8], %s266
        %p268 = scmp.lt.s32.totalorder %s21, 1
        %s269 = scalar_select %p268, %s21, 1
        %s270 = smul.addr %s269, 3
        %s271 = smul.addr %s270, 8
        %s272 = scalar_lea.vmem %s0, %s271
        %v273 = vld [vmem:[#allocation7] sm:$0xff]
        %v274 = vld [vmem:[#allocation7 + $0x8] sm:$0xff]
        %v275 = vld [vmem:[#allocation7 + $0x10] sm:$0xff]
        %v276 = vld [vmem:[#allocation7 + $0x18] sm:$0xff]
        %v277 = vld [vmem:[#allocation7 + $0x20] sm:$0xff]
        %v278 = vld [vmem:[#allocation7 + $0x28] sm:$0xff]
        %v279 = vld [vmem:[#allocation7 + $0x30] sm:$0xff]
        %v280 = vld [vmem:[#allocation7 + $0x38] sm:$0xff]
        %v281 = vld [vmem:[#allocation7 + $0x40] sm:$0xff]
        %v282 = vld [vmem:[#allocation7 + $0x48] sm:$0xff]
        %v283 = vld [vmem:[#allocation7 + $0x50] sm:$0xff]
        %v284 = vld [vmem:[#allocation7 + $0x58] sm:$0xff]
        %v285 = vld [vmem:[#allocation7 + $0x60] sm:$0xff]
        %v286 = vld [vmem:[#allocation7 + $0x68] sm:$0xff]
        %v287 = vld [vmem:[#allocation7 + $0x70] sm:$0xff]
        %v288 = vld [vmem:[#allocation7 + $0x78] sm:$0xff]
        %v289 = vld [vmem:[%s272] sm:$0xff]
        %v290 = vld [vmem:[%s272 + $0x8] sm:$0xff]
        %v291 = vld [vmem:[%s272 + $0x10] sm:$0x3]
        %v292 = vld [vmem:[#allocation2] sm:$0xff]
        %v293 = vld [vmem:[#allocation2 + $0x8] sm:$0xff]
        %v294 = vld [vmem:[#allocation2 + $0x10] sm:$0xff]
        %v295 = vld [vmem:[#allocation2 + $0x18] sm:$0xff]
        %v296 = vld [vmem:[#allocation2 + $0x20] sm:$0xff]
        %v297 = vld [vmem:[#allocation2 + $0x28] sm:$0xff]
        %v298 = vld [vmem:[#allocation2 + $0x30] sm:$0xff]
        %v299 = vld [vmem:[#allocation2 + $0x38] sm:$0xff]
        %s300 = scalar_lea.vmem [#allocation2], 64
        %v301 = vld [vmem:[%s300] sm:$0xff]
        %v302 = vld [vmem:[%s300 + $0x8] sm:$0xff]
        %v303 = vld [vmem:[%s300 + $0x10] sm:$0xff]
        %v304 = vld [vmem:[%s300 + $0x18] sm:$0xff]
        %v305 = vld [vmem:[%s300 + $0x20] sm:$0xff]
        %v306 = vld [vmem:[%s300 + $0x28] sm:$0xff]
        %v307 = vld [vmem:[%s300 + $0x30] sm:$0xff]
        %v308 = vld [vmem:[%s300 + $0x38] sm:$0xff]
        %vm312 = vcmask 1046528
        %v313 = vrot.slane %v289, 1
        %v314 = vrot.slane %v290, 1
        %v315 = vsel %vm312, %v313, %v314
        %v316 = vrot.slane %v291, 1
        %v317 = vsel %vm312, %v314, %v316
        %vm318 = vcmask 523264
        %v319 = vsel %vm318, %v315, 0
        %v321 = vsel %vm318, %v317, 0
        %323 = vmatpush.msra.mxu0 0.0
        %324 = vmatpush.msra.mxu0 0.0
        %325 = vmatpush.msra.mxu0 0.0
        %326 = vmatpush.msra.mxu0 0.0
        %327 = vmatpush.msra.mxu0 0.0
        %328 = vmatpush.msra.mxu0 0.0
        %329 = vmatpush.msra.mxu0 0.0
        %330 = vmatpush.msra.mxu0 0.0
        %331 = vmatpush.msra.mxu0 %v308
        %332 = vmatpush.msra.mxu0 %v307
        %333 = vmatpush.msra.mxu0 %v306
        %334 = vmatpush.msra.mxu0 %v305
        %335 = vmatpush.msra.mxu0 %v304
        %336 = vmatpush.msra.mxu0 %v303
        %337 = vmatpush.msra.mxu0 %v302
        %338 = vmatpush.msra.mxu0 %v301
        %339 = vmatmul.f32.gmra.mxu0 %v319
        %v340 = vpop.f32.mrf.mxu0
        %v341 = vadd.f32 0.0, %v340
        %342 = vmatmul.f32.gmra.mxu0 %v321
        %v343 = vpop.f32.mrf.mxu0
        %v344 = vadd.f32 0.0, %v343
        %345 = vdwg.mxu0
        %v346 = vsel %vm318, %v289, 0
        %v348 = vsel %vm318, %v290, 0
        %350 = vmatpush.msra.mxu0 0.0
        %351 = vmatpush.msra.mxu0 0.0
        %352 = vmatpush.msra.mxu0 0.0
        %353 = vmatpush.msra.mxu0 0.0
        %354 = vmatpush.msra.mxu0 0.0
        %355 = vmatpush.msra.mxu0 0.0
        %356 = vmatpush.msra.mxu0 0.0
        %357 = vmatpush.msra.mxu0 0.0
        %358 = vmatpush.msra.mxu0 %v299
        %359 = vmatpush.msra.mxu0 %v298
        %360 = vmatpush.msra.mxu0 %v297
        %361 = vmatpush.msra.mxu0 %v296
        %362 = vmatpush.msra.mxu0 %v295
        %363 = vmatpush.msra.mxu0 %v294
        %364 = vmatpush.msra.mxu0 %v293
        %365 = vmatpush.msra.mxu0 %v292
        %366 = vmatmul.f32.gmra.mxu0 %v346
        %v367 = vpop.f32.mrf.mxu0
        %v368 = vadd.f32 %v341, %v367
        %369 = vmatmul.f32.gmra.mxu0 %v348
        %v370 = vpop.f32.mrf.mxu0
        %v371 = vadd.f32 %v344, %v370
        %372 = vdwg.mxu0
        %s373 = scalar_lea.vmem [#allocation2], 128
        %v374 = vld [vmem:[%s373] sm:$0xff]
        %v375 = vld [vmem:[%s373 + $0x8] sm:$0xff]
        %v376 = vld [vmem:[%s373 + $0x10] sm:$0xff]
        %v377 = vld [vmem:[%s373 + $0x18] sm:$0xff]
        %v378 = vld [vmem:[%s373 + $0x20] sm:$0xff]
        %v379 = vld [vmem:[%s373 + $0x28] sm:$0xff]
        %v380 = vld [vmem:[%s373 + $0x30] sm:$0xff]
        %v381 = vld [vmem:[%s373 + $0x38] sm:$0xff]
        %vm382 = vcmask 1045504
        %v383 = vrot.slane %v289, 2
        %v384 = vrot.slane %v290, 2
        %v385 = vsel %vm382, %v383, %v384
        %v386 = vrot.slane %v291, 2
        %v387 = vsel %vm382, %v384, %v386
        %v388 = vsel %vm318, %v385, 0
        %v390 = vsel %vm318, %v387, 0
        %392 = vmatpush.msra.mxu0 0.0
        %393 = vmatpush.msra.mxu0 0.0
        %394 = vmatpush.msra.mxu0 0.0
        %395 = vmatpush.msra.mxu0 0.0
        %396 = vmatpush.msra.mxu0 0.0
        %397 = vmatpush.msra.mxu0 0.0
        %398 = vmatpush.msra.mxu0 0.0
        %399 = vmatpush.msra.mxu0 0.0
        %400 = vmatpush.msra.mxu0 %v381
        %401 = vmatpush.msra.mxu0 %v380
        %402 = vmatpush.msra.mxu0 %v379
        %403 = vmatpush.msra.mxu0 %v378
        %404 = vmatpush.msra.mxu0 %v377
        %405 = vmatpush.msra.mxu0 %v376
        %406 = vmatpush.msra.mxu0 %v375
        %407 = vmatpush.msra.mxu0 %v374
        %408 = vmatmul.f32.gmra.mxu0 %v388
        %v409 = vpop.f32.mrf.mxu0
        %v410 = vadd.f32 0.0, %v409
        %411 = vmatmul.f32.gmra.mxu0 %v390
        %v412 = vpop.f32.mrf.mxu0
        %v413 = vadd.f32 0.0, %v412
        %414 = vdwg.mxu0
        %v415 = vadd.f32 %v368, %v410
        %v416 = vadd.f32 %v371, %v413
        %417 = vmatpush.msra.mxu0 %v288
        %418 = vmatpush.msra.mxu0 %v287
        %419 = vmatpush.msra.mxu0 %v286
        %420 = vmatpush.msra.mxu0 %v285
        %421 = vmatpush.msra.mxu0 %v284
        %422 = vmatpush.msra.mxu0 %v283
        %423 = vmatpush.msra.mxu0 %v282
        %424 = vmatpush.msra.mxu0 %v281
        %425 = vmatpush.msra.mxu0 %v280
        %426 = vmatpush.msra.mxu0 %v279
        %427 = vmatpush.msra.mxu0 %v278
        %428 = vmatpush.msra.mxu0 %v277
        %429 = vmatpush.msra.mxu0 %v276
        %430 = vmatpush.msra.mxu0 %v275
        %431 = vmatpush.msra.mxu0 %v274
        %432 = vmatpush.msra.mxu0 %v273
        %433 = vmatmul.f32.gmra.mxu0 %v415
        %v434 = vpop.f32.mrf.mxu0
        %v435 = vadd.f32 0.0, %v434
        %436 = vmatmul.f32.gmra.mxu0 %v416
        %v437 = vpop.f32.mrf.mxu0
        %v438 = vadd.f32 0.0, %v437
        %439 = vdwg.mxu0
        %v440 = vadd.f32 %v435, %v438
        %v441 = vrot.slane %v440, 4
        %v442 = vadd.f32 %v440, %v441
        %v443 = vrot.slane %v442, 2
        %v444 = vadd.f32 %v442, %v443
        %v445 = vrot.slane %v444, 1
        %v446 = vadd.f32 %v444, %v445
        %v447 = vsub.f32 %v415, %v446
        %v448 = vsub.f32 %v416, %v446
        %v449 = vmul.f32 %v447, %v447
        %v450 = vmul.f32 %v448, %v448
        %451 = vmatpush.msra.mxu0 %v288
        %452 = vmatpush.msra.mxu0 %v287
        %453 = vmatpush.msra.mxu0 %v286
        %454 = vmatpush.msra.mxu0 %v285
        %455 = vmatpush.msra.mxu0 %v284
        %456 = vmatpush.msra.mxu0 %v283
        %457 = vmatpush.msra.mxu0 %v282
        %458 = vmatpush.msra.mxu0 %v281
        %459 = vmatpush.msra.mxu0 %v280
        %460 = vmatpush.msra.mxu0 %v279
        %461 = vmatpush.msra.mxu0 %v278
        %462 = vmatpush.msra.mxu0 %v277
        %463 = vmatpush.msra.mxu0 %v276
        %464 = vmatpush.msra.mxu0 %v275
        %465 = vmatpush.msra.mxu0 %v274
        %466 = vmatpush.msra.mxu0 %v273
        %467 = vmatmul.f32.gmra.mxu0 %v449
        %v468 = vpop.f32.mrf.mxu0
        %v469 = vadd.f32 0.0, %v468
        %470 = vmatmul.f32.gmra.mxu0 %v450
        %v471 = vpop.f32.mrf.mxu0
        %v472 = vadd.f32 0.0, %v471
        %473 = vdwg.mxu0
        %v474 = vadd.f32 %v469, %v472
        %v475 = vrot.slane %v474, 4
        %v476 = vadd.f32 %v474, %v475
        %v477 = vrot.slane %v476, 2
        %v478 = vadd.f32 %v476, %v477
        %v479 = vrot.slane %v478, 1
        %v480 = vadd.f32 %v478, %v479
        %v481 = vadd.f32 %v480, 1e-05
        %v482 = vrsqrt.pop %v481
        %v483 = vmul.f32 %v482, %v481
        %v484 = vmul.f32 %v483, %v482
        %v485 = vmul.f32 0.5, %v484
        %v486 = vsub.f32 1.5, %v485
        %v487 = vmul.f32 %v482, %v486
        %vm488 = vweird.f32 %v481
        %vm489 = vweird.f32 %v482
        %vm490 = vmor %vm488, %vm489
        %v491 = vsel %vm490, %v482, %v487
        %v492 = vmul.f32 %v447, %v491
        %v493 = vmul.f32 %v448, %v491
        %vm494 = vcmp.ge.f32.partialorder %v492, 0.0
        %vm495 = vcmp.ge.f32.partialorder %v493, 0.0
        %v496 = vmul.f32 %v492, 0.01
        %v497 = vmul.f32 %v493, 0.01
        %v498 = vsel %vm494, %v492, %v496
        %v499 = vsel %vm495, %v493, %v497
        %vm502 = vcmask 1040384
        %v503 = vrot.slane %v498, 7
        %v504 = vrot.slane %v499, 7
        %v505 = vsel %vm502, %v503, %v504
        %v508 = vsel %vm502, 0.0, %v503
        %v509 = vrot.slane %v498, 1
        %v510 = vrot.slane %v499, 1
        %v511 = vsel %vm312, %v509, %v510
        %v514 = vsel %vm312, %v510, 0.0
        %v515 = vld [vmem:[#allocation5] sm:$0xff]
        %v516 = vld [vmem:[#allocation5 + $0x8] sm:$0xff]
        %v517 = vld [vmem:[#allocation5 + $0x10] sm:$0xff]
        %v518 = vld [vmem:[#allocation5 + $0x18] sm:$0xff]
        %v519 = vld [vmem:[#allocation5 + $0x20] sm:$0xff]
        %v520 = vld [vmem:[#allocation5 + $0x28] sm:$0xff]
        %v521 = vld [vmem:[#allocation5 + $0x30] sm:$0xff]
        %v522 = vld [vmem:[#allocation5 + $0x38] sm:$0xff]
        %v523 = vld [vmem:[#allocation5 + $0x40] sm:$0xff]
        %v524 = vld [vmem:[#allocation5 + $0x48] sm:$0xff]
        %v525 = vld [vmem:[#allocation5 + $0x50] sm:$0xff]
        %v526 = vld [vmem:[#allocation5 + $0x58] sm:$0xff]
        %v527 = vld [vmem:[#allocation5 + $0x60] sm:$0xff]
        %v528 = vld [vmem:[#allocation5 + $0x68] sm:$0xff]
        %v529 = vld [vmem:[#allocation5 + $0x70] sm:$0xff]
        %v530 = vld [vmem:[#allocation5 + $0x78] sm:$0xff]
        %s531 = scalar_lea.vmem [#allocation5], 128
        %v532 = vld [vmem:[%s531] sm:$0xff]
        %v533 = vld [vmem:[%s531 + $0x8] sm:$0xff]
        %v534 = vld [vmem:[%s531 + $0x10] sm:$0xff]
        %v535 = vld [vmem:[%s531 + $0x18] sm:$0xff]
        %v536 = vld [vmem:[%s531 + $0x20] sm:$0xff]
        %v537 = vld [vmem:[%s531 + $0x28] sm:$0xff]
        %v538 = vld [vmem:[%s531 + $0x30] sm:$0xff]
        %v539 = vld [vmem:[%s531 + $0x38] sm:$0xff]
        %v540 = vld [vmem:[%s531 + $0x40] sm:$0xff]
        %v541 = vld [vmem:[%s531 + $0x48] sm:$0xff]
        %v542 = vld [vmem:[%s531 + $0x50] sm:$0xff]
        %v543 = vld [vmem:[%s531 + $0x58] sm:$0xff]
        %v544 = vld [vmem:[%s531 + $0x60] sm:$0xff]
        %v545 = vld [vmem:[%s531 + $0x68] sm:$0xff]
        %v546 = vld [vmem:[%s531 + $0x70] sm:$0xff]
        %v547 = vld [vmem:[%s531 + $0x78] sm:$0xff]
        %548 = vmatpush.msra.mxu0 %v547
        %549 = vmatpush.msra.mxu0 %v546
        %550 = vmatpush.msra.mxu0 %v545
        %551 = vmatpush.msra.mxu0 %v544
        %552 = vmatpush.msra.mxu0 %v543
        %553 = vmatpush.msra.mxu0 %v542
        %554 = vmatpush.msra.mxu0 %v541
        %555 = vmatpush.msra.mxu0 %v540
        %556 = vmatpush.msra.mxu0 %v539
        %557 = vmatpush.msra.mxu0 %v538
        %558 = vmatpush.msra.mxu0 %v537
        %559 = vmatpush.msra.mxu0 %v536
        %560 = vmatpush.msra.mxu0 %v535
        %561 = vmatpush.msra.mxu0 %v534
        %562 = vmatpush.msra.mxu0 %v533
        %563 = vmatpush.msra.mxu0 %v532
        %564 = vmatmul.f32.gmra.mxu0 %v498
        %v565 = vpop.f32.mrf.mxu0
        %v566 = vadd.f32 0.0, %v565
        %567 = vmatmul.f32.gmra.mxu0 %v499
        %v568 = vpop.f32.mrf.mxu0
        %v569 = vadd.f32 0.0, %v568
        %570 = vdwg.mxu0
        %571 = vmatpush.msra.mxu0 %v530
        %572 = vmatpush.msra.mxu0 %v529
        %573 = vmatpush.msra.mxu0 %v528
        %574 = vmatpush.msra.mxu0 %v527
        %575 = vmatpush.msra.mxu0 %v526
        %576 = vmatpush.msra.mxu0 %v525
        %577 = vmatpush.msra.mxu0 %v524
        %578 = vmatpush.msra.mxu0 %v523
        %579 = vmatpush.msra.mxu0 %v522
        %580 = vmatpush.msra.mxu0 %v521
        %581 = vmatpush.msra.mxu0 %v520
        %582 = vmatpush.msra.mxu0 %v519
        %583 = vmatpush.msra.mxu0 %v518
        %584 = vmatpush.msra.mxu0 %v517
        %585 = vmatpush.msra.mxu0 %v516
        %586 = vmatpush.msra.mxu0 %v515
        %587 = vmatmul.f32.gmra.mxu0 %v508
        %v588 = vpop.f32.mrf.mxu0
        %v589 = vadd.f32 %v566, %v588
        %590 = vmatmul.f32.gmra.mxu0 %v505
        %v591 = vpop.f32.mrf.mxu0
        %v592 = vadd.f32 %v569, %v591
        %593 = vdwg.mxu0
        %s594 = scalar_lea.vmem [#allocation5], 256
        %v595 = vld [vmem:[%s594] sm:$0xff]
        %v596 = vld [vmem:[%s594 + $0x8] sm:$0xff]
        %v597 = vld [vmem:[%s594 + $0x10] sm:$0xff]
        %v598 = vld [vmem:[%s594 + $0x18] sm:$0xff]
        %v599 = vld [vmem:[%s594 + $0x20] sm:$0xff]
        %v600 = vld [vmem:[%s594 + $0x28] sm:$0xff]
        %v601 = vld [vmem:[%s594 + $0x30] sm:$0xff]
        %v602 = vld [vmem:[%s594 + $0x38] sm:$0xff]
        %v603 = vld [vmem:[%s594 + $0x40] sm:$0xff]
        %v604 = vld [vmem:[%s594 + $0x48] sm:$0xff]
        %v605 = vld [vmem:[%s594 + $0x50] sm:$0xff]
        %v606 = vld [vmem:[%s594 + $0x58] sm:$0xff]
        %v607 = vld [vmem:[%s594 + $0x60] sm:$0xff]
        %v608 = vld [vmem:[%s594 + $0x68] sm:$0xff]
        %v609 = vld [vmem:[%s594 + $0x70] sm:$0xff]
        %v610 = vld [vmem:[%s594 + $0x78] sm:$0xff]
        %611 = vmatpush.msra.mxu0 %v610
        %612 = vmatpush.msra.mxu0 %v609
        %613 = vmatpush.msra.mxu0 %v608
        %614 = vmatpush.msra.mxu0 %v607
        %615 = vmatpush.msra.mxu0 %v606
        %616 = vmatpush.msra.mxu0 %v605
        %617 = vmatpush.msra.mxu0 %v604
        %618 = vmatpush.msra.mxu0 %v603
        %619 = vmatpush.msra.mxu0 %v602
        %620 = vmatpush.msra.mxu0 %v601
        %621 = vmatpush.msra.mxu0 %v600
        %622 = vmatpush.msra.mxu0 %v599
        %623 = vmatpush.msra.mxu0 %v598
        %624 = vmatpush.msra.mxu0 %v597
        %625 = vmatpush.msra.mxu0 %v596
        %626 = vmatpush.msra.mxu0 %v595
        %627 = vmatmul.f32.gmra.mxu0 %v511
        %v628 = vpop.f32.mrf.mxu0
        %v629 = vadd.f32 0.0, %v628
        %630 = vmatmul.f32.gmra.mxu0 %v514
        %v631 = vpop.f32.mrf.mxu0
        %v632 = vadd.f32 0.0, %v631
        %633 = vdwg.mxu0
        %v634 = vadd.f32 %v589, %v629
        %v635 = vadd.f32 %v592, %v632
        %636 = vmatpush.msra.mxu0 %v288
        %637 = vmatpush.msra.mxu0 %v287
        %638 = vmatpush.msra.mxu0 %v286
        %639 = vmatpush.msra.mxu0 %v285
        %640 = vmatpush.msra.mxu0 %v284
        %641 = vmatpush.msra.mxu0 %v283
        %642 = vmatpush.msra.mxu0 %v282
        %643 = vmatpush.msra.mxu0 %v281
        %644 = vmatpush.msra.mxu0 %v280
        %645 = vmatpush.msra.mxu0 %v279
        %646 = vmatpush.msra.mxu0 %v278
        %647 = vmatpush.msra.mxu0 %v277
        %648 = vmatpush.msra.mxu0 %v276
        %649 = vmatpush.msra.mxu0 %v275
        %650 = vmatpush.msra.mxu0 %v274
        %651 = vmatpush.msra.mxu0 %v273
        %652 = vmatmul.f32.gmra.mxu0 %v634
        %v653 = vpop.f32.mrf.mxu0
        %v654 = vadd.f32 0.0, %v653
        %655 = vmatmul.f32.gmra.mxu0 %v635
        %v656 = vpop.f32.mrf.mxu0
        %v657 = vadd.f32 0.0, %v656
        %658 = vdwg.mxu0
        %v659 = vadd.f32 %v654, %v657
        %v660 = vrot.slane %v659, 4
        %v661 = vadd.f32 %v659, %v660
        %v662 = vrot.slane %v661, 2
        %v663 = vadd.f32 %v661, %v662
        %v664 = vrot.slane %v663, 1
        %v665 = vadd.f32 %v663, %v664
        %v666 = vsub.f32 %v634, %v665
        %v667 = vsub.f32 %v635, %v665
        %v668 = vmul.f32 %v666, %v666
        %v669 = vmul.f32 %v667, %v667
        %670 = vmatpush.msra.mxu0 %v288
        %671 = vmatpush.msra.mxu0 %v287
        %672 = vmatpush.msra.mxu0 %v286
        %673 = vmatpush.msra.mxu0 %v285
        %674 = vmatpush.msra.mxu0 %v284
        %675 = vmatpush.msra.mxu0 %v283
        %676 = vmatpush.msra.mxu0 %v282
        %677 = vmatpush.msra.mxu0 %v281
        %678 = vmatpush.msra.mxu0 %v280
        %679 = vmatpush.msra.mxu0 %v279
        %680 = vmatpush.msra.mxu0 %v278
        %681 = vmatpush.msra.mxu0 %v277
        %682 = vmatpush.msra.mxu0 %v276
        %683 = vmatpush.msra.mxu0 %v275
        %684 = vmatpush.msra.mxu0 %v274
        %685 = vmatpush.msra.mxu0 %v273
        %686 = vmatmul.f32.gmra.mxu0 %v668
        %v687 = vpop.f32.mrf.mxu0
        %v688 = vadd.f32 0.0, %v687
        %689 = vmatmul.f32.gmra.mxu0 %v669
        %v690 = vpop.f32.mrf.mxu0
        %v691 = vadd.f32 0.0, %v690
        %692 = vdwg.mxu0
        %v693 = vadd.f32 %v688, %v691
        %v694 = vrot.slane %v693, 4
        %v695 = vadd.f32 %v693, %v694
        %v696 = vrot.slane %v695, 2
        %v697 = vadd.f32 %v695, %v696
        %v698 = vrot.slane %v697, 1
        %v699 = vadd.f32 %v697, %v698
        %v700 = vadd.f32 %v699, 1e-05
        %v701 = vrsqrt.pop %v700
        %v702 = vmul.f32 %v701, %v700
        %v703 = vmul.f32 %v702, %v701
        %v704 = vmul.f32 0.5, %v703
        %v705 = vsub.f32 1.5, %v704
        %v706 = vmul.f32 %v701, %v705
        %vm707 = vweird.f32 %v700
        %vm708 = vweird.f32 %v701
        %vm709 = vmor %vm707, %vm708
        %v710 = vsel %vm709, %v701, %v706
        %v711 = vmul.f32 %v666, %v710
        %v712 = vmul.f32 %v667, %v710
        %v713 = vld [vmem:[%s3] sm:$0xff]
        %v714 = vld [vmem:[%s3 + $0x8] sm:$0xff]
        %v715 = vld [vmem:[%s3 + $0x10] sm:$0xff]
        %v716 = vld [vmem:[%s3 + $0x18] sm:$0xff]
        %v717 = vld [vmem:[%s3 + $0x20] sm:$0xff]
        %v718 = vld [vmem:[%s3 + $0x28] sm:$0xff]
        %v719 = vld [vmem:[%s3 + $0x30] sm:$0xff]
        %v720 = vld [vmem:[%s3 + $0x38] sm:$0xff]
        %721 = vmatpush.msra.mxu0 0.0
        %722 = vmatpush.msra.mxu0 0.0
        %723 = vmatpush.msra.mxu0 0.0
        %724 = vmatpush.msra.mxu0 0.0
        %725 = vmatpush.msra.mxu0 0.0
        %726 = vmatpush.msra.mxu0 0.0
        %727 = vmatpush.msra.mxu0 0.0
        %728 = vmatpush.msra.mxu0 0.0
        %729 = vmatpush.msra.mxu0 %v720
        %730 = vmatpush.msra.mxu0 %v719
        %731 = vmatpush.msra.mxu0 %v718
        %732 = vmatpush.msra.mxu0 %v717
        %733 = vmatpush.msra.mxu0 %v716
        %734 = vmatpush.msra.mxu0 %v715
        %735 = vmatpush.msra.mxu0 %v714
        %736 = vmatpush.msra.mxu0 %v713
        %737 = vmatmul.f32.gmra.mxu0 %v319
        %v738 = vpop.f32.mrf.mxu0
        %v739 = vadd.f32 0.0, %v738
        %740 = vmatmul.f32.gmra.mxu0 %v321
        %v741 = vpop.f32.mrf.mxu0
        %v742 = vadd.f32 0.0, %v741
        %743 = vdwg.mxu0
        %744 = vmatpush.msra.mxu0 %v288
        %745 = vmatpush.msra.mxu0 %v287
        %746 = vmatpush.msra.mxu0 %v286
        %747 = vmatpush.msra.mxu0 %v285
        %748 = vmatpush.msra.mxu0 %v284
        %749 = vmatpush.msra.mxu0 %v283
        %750 = vmatpush.msra.mxu0 %v282
        %751 = vmatpush.msra.mxu0 %v281
        %752 = vmatpush.msra.mxu0 %v280
        %753 = vmatpush.msra.mxu0 %v279
        %754 = vmatpush.msra.mxu0 %v278
        %755 = vmatpush.msra.mxu0 %v277
        %756 = vmatpush.msra.mxu0 %v276
        %757 = vmatpush.msra.mxu0 %v275
        %758 = vmatpush.msra.mxu0 %v274
        %759 = vmatpush.msra.mxu0 %v273
        %760 = vmatmul.f32.gmra.mxu0 %v739
        %v761 = vpop.f32.mrf.mxu0
        %v762 = vadd.f32 0.0, %v761
        %763 = vmatmul.f32.gmra.mxu0 %v742
        %v764 = vpop.f32.mrf.mxu0
        %v765 = vadd.f32 0.0, %v764
        %766 = vdwg.mxu0
        %v767 = vadd.f32 %v762, %v765
        %v768 = vrot.slane %v767, 4
        %v769 = vadd.f32 %v767, %v768
        %v770 = vrot.slane %v769, 2
        %v771 = vadd.f32 %v769, %v770
        %v772 = vrot.slane %v771, 1
        %v773 = vadd.f32 %v771, %v772
        %v774 = vsub.f32 %v739, %v773
        %v775 = vsub.f32 %v742, %v773
        %v776 = vmul.f32 %v774, %v774
        %v777 = vmul.f32 %v775, %v775
        %778 = vmatpush.msra.mxu0 %v288
        %779 = vmatpush.msra.mxu0 %v287
        %780 = vmatpush.msra.mxu0 %v286
        %781 = vmatpush.msra.mxu0 %v285
        %782 = vmatpush.msra.mxu0 %v284
        %783 = vmatpush.msra.mxu0 %v283
        %784 = vmatpush.msra.mxu0 %v282
        %785 = vmatpush.msra.mxu0 %v281
        %786 = vmatpush.msra.mxu0 %v280
        %787 = vmatpush.msra.mxu0 %v279
        %788 = vmatpush.msra.mxu0 %v278
        %789 = vmatpush.msra.mxu0 %v277
        %790 = vmatpush.msra.mxu0 %v276
        %791 = vmatpush.msra.mxu0 %v275
        %792 = vmatpush.msra.mxu0 %v274
        %793 = vmatpush.msra.mxu0 %v273
        %794 = vmatmul.f32.gmra.mxu0 %v776
        %v795 = vpop.f32.mrf.mxu0
        %v796 = vadd.f32 0.0, %v795
        %797 = vmatmul.f32.gmra.mxu0 %v777
        %v798 = vpop.f32.mrf.mxu0
        %v799 = vadd.f32 0.0, %v798
        %800 = vdwg.mxu0
        %v801 = vadd.f32 %v796, %v799
        %v802 = vrot.slane %v801, 4
        %v803 = vadd.f32 %v801, %v802
        %v804 = vrot.slane %v803, 2
        %v805 = vadd.f32 %v803, %v804
        %v806 = vrot.slane %v805, 1
        %v807 = vadd.f32 %v805, %v806
        %v808 = vadd.f32 %v807, 1e-05
        %v809 = vrsqrt.pop %v808
        %v810 = vmul.f32 %v809, %v808
        %v811 = vmul.f32 %v810, %v809
        %v812 = vmul.f32 0.5, %v811
        %v813 = vsub.f32 1.5, %v812
        %v814 = vmul.f32 %v809, %v813
        %vm815 = vweird.f32 %v808
        %vm816 = vweird.f32 %v809
        %vm817 = vmor %vm815, %vm816
        %v818 = vsel %vm817, %v809, %v814
        %v819 = vmul.f32 %v774, %v818
        %v820 = vmul.f32 %v775, %v818
        %v821 = vadd.f32 %v711, %v819
        %v822 = vadd.f32 %v712, %v820
        %vm823 = vcmp.ge.f32.partialorder %v821, 0.0
        %vm824 = vcmp.ge.f32.partialorder %v822, 0.0
        %v825 = vmul.f32 %v821, 0.01
        %v826 = vmul.f32 %v822, 0.01
        %v827 = vsel %vm823, %v821, %v825
        %v828 = vsel %vm824, %v822, %v826
        %829 = vst [vmem:[%s267] sm:$0xff] %v827
        %830 = vst [vmem:[%s267 + $0x8] sm:$0xff] %v828
        %s831 = sand.u32 %s139, 1
        %s832 = scalar_lea.sflag [#allocation4], %s831
        %s833 = sand.u32 %s139, 1
        %s834 = smul.addr %s833, 16
        %s835 = scalar_lea.vmem [#allocation8], %s834
        // Predicated region
        $region53: #{tpu_custom_call.1} parent=39 // pred_check
          %p836 = pneg %p149
        $region54: #{tpu_custom_call.1} parent=39 // pred_check_branch
          %838 = sbr.rel (%p836) target = $region56
        $region55: #{tpu_custom_call.1} parent=39 // pred_region
          %840 = vsyncadd %s832, 0
          %s841 = smul.addr %s21, 2
          %s842 = smul.addr %s841, 8
          %s843 = scalar_lea.hbm %s5, %s842
          %s844 = sshll.u32 %s835, 4
          %s845 = int_to_ptr.vmem [resolvable:$true] %s844
          %s846 = sshll.u32 %s843, 4
          %s847 = int_to_ptr.hbm [resolvable:$true] %s846
          %852 = dma.vmem_to_hbm [thread:$0]  %s845, 256, %s847, %s832, 128, 128, 8
        $region56: #{tpu_custom_call.1} parent=39 // pred_fallthru
          _
      $region40: #{tpu_custom_call.1} parent=5 // pred_fallthru
        _
      %p853 = scmp.le.s32.totalorder 2, %s16
      // Predicated region
      $region57: #{tpu_custom_call.1} parent=5 // pred_check
        %p854 = pneg %p853
      $region58: #{tpu_custom_call.1} parent=5 // pred_check_branch
        %856 = sbr.rel (%p854) target = $region60
      $region59: #{tpu_custom_call.1} parent=5 // pred_region
        %s857 = ssub.s32 %s16, 2
        // Predicated region
        $region61: #{tpu_custom_call.1} parent=59 // pred_check
          %p858 = pneg %p155
        $region62: #{tpu_custom_call.1} parent=59 // pred_check_branch
          %860 = sbr.rel (%p858) target = $region64
        $region63: #{tpu_custom_call.1} parent=59 // pred_region
          %s861 = sand.u32 %s140, 1
          %s862 = scalar_lea.sflag [#allocation4], %s861
          %s863 = sand.u32 %s140, 1
          %s864 = smul.addr %s863, 16
          %s865 = scalar_lea.vmem [#allocation8], %s864
          %867 = dma.done %s862, 256
        $region64: #{tpu_custom_call.1} parent=59 // pred_fallthru
          _
      $region60: #{tpu_custom_call.1} parent=5 // pred_fallthru
        _
    $region6: #{tpu_custom_call.1} parent=1 // loop_footer
      %s20 = sadd.s32 1, %s16
    $region7: #{tpu_custom_call.1} parent=1 // loop_footer_branch
      %15 = sbr.rel target = $region3
    $region8: #{tpu_custom_call.1} parent=1 // loop_exit
      _
    %868 = vsyncpa [#allocation3], 1
    %s869 = scalar_lea.sflag [#allocation3], 1
    %870 = vsyncpa %s869, 1
    %871 = vsyncpa [#allocation6], 1
    %872 = vsyncpa [#allocation4], 1
    %s873 = scalar_lea.sflag [#allocation4], 1
    %874 = vsyncpa %s873, 1

</llo_original>
